<compile_context>
chip_gen: v5e
topology: v5e:2x2
jax: 0.10.0
libtpu: 0.0.40
codegen_flags: <defaults>
</compile_context>

<pallas_src>
import functools

import jax
import jax.numpy as jnp
from jax import lax
from jax.experimental import pallas as pl
from jax.experimental.pallas import tpu as pltpu

_EPS = 1e-8  # matches torch.nn.functional.cosine_similarity eps
_LANES = 128


def _round_up(x, m):
    return (x + m - 1) // m * m


def _is_v5e():
    try:
        kind = jax.devices()[0].device_kind.lower()
    except Exception:
        return False
    return ("v5 lite" in kind) or ("v5e" in kind) or ("v5litepod" in kind)


def _pick_compute_dtype(input_dtype, mxu_dtype=None):
    """MXU feed dtype.  v5e: bf16 by default for f32 inputs (f32 accumulation)."""
    if mxu_dtype is not None:
        return jnp.dtype(mxu_dtype)
    if jnp.dtype(input_dtype) == jnp.float32 and _is_v5e():
        return jnp.dtype(jnp.bfloat16)
    return jnp.dtype(input_dtype)


def _vmem_estimate(tm, tn, d, itemsize):
    # double-buffered row/col blocks + labels + output slab + ~5 (Tm,Tn) f32 temps
    temps = 5 * tm * tn * 4
    bufs = 2 * (tm * d * itemsize + tn * d * itemsize + tm * 3 * _LANES * 4 + tm * 4 + tn * 4)
    return temps + bufs


def _pick_tiles(n_pad, d, itemsize, block_m, block_n, budget=40 * 1024 * 1024):
    if block_n is not None:
        tn = int(block_n)
    else:
        tn = max(t for t in (512, 256, 128) if n_pad % t == 0)
    if block_m is not None:
        tm = int(block_m)
    else:
        cands = [t for t in (512, 256, 128, 64, 32, 16, 8) if n_pad % t == 0]
        fit = [t for t in cands if _vmem_estimate(t, tn, d, itemsize) <= budget] or [cands[-1]]
        # Prefer the largest row tile that still leaves >=2 row blocks (v7x megacore).
        two_core = [t for t in fit if n_pad // t >= 2]
        tm = (two_core or fit)[0]
    if n_pad % tm or n_pad % tn:
        raise ValueError(f"block sizes ({tm},{tn}) must divide padded N={n_pad}")
    return tm, tn


def _supcon_kernel(xr_ref, xc_ref, li_ref, lj_ref,   # inputs (pre-normalized x, labels)
                   acc_ref,                          # (Tm, 3*128) lane-dense accumulator
                   *, inv_t, n_valid, mask_cols):
    """One (Tm, Tn) block of the N x N cosine-similarity problem."""
    j = pl.program_id(1)
    tn = xc_ref.shape[0]
    nseg = tn // _LANES

    @pl.when(j == 0)
    def _():
        acc_ref[...] = jnp.zeros_like(acc_ref)

    # (Tm, Tn) similarity block on the MXU (inputs already unit-normalized).
    # contraction ((1,),(1,)) == A @ B^T without materializing a transpose.
    sim = lax.dot_general(xr_ref[...], xc_ref[...], (((1,), (1,)), ((), ())),
                          preferred_element_type=jnp.float32)

    same = li_ref[...] == lj_ref[...]            # (Tm,1) == (1,Tn) -> (Tm,Tn)
    sim_e = sim
    if mask_cols:                                # static: only when N was padded
        colmask = (j * tn + lax.broadcasted_iota(jnp.int32, (1, tn), 1)) < n_valid
        same = jnp.logical_and(same, colmask)
        sim_e = jnp.where(colmask, sim, jnp.float32(-1e30))  # exp -> 0 for padded cols

    same_f = same.astype(jnp.float32)
    lsim = jnp.where(same, sim, jnp.float32(0.0))            # label-weighted sim
    esim = jnp.exp((sim_e - 1.0) * inv_t)                    # stabilized: sim <= 1

    def lane_fold(mat):
        # (Tm, Tn) -> (Tm, 128): sum static 128-lane slices (VPU adds, no XLU).
        s = mat[:, :_LANES]
        for k in range(1, nseg):
            s = s + mat[:, k * _LANES:(k + 1) * _LANES]
        return s

    acc_ref[:, 0 * _LANES:1 * _LANES] += lane_fold(same_f)
    acc_ref[:, 1 * _LANES:2 * _LANES] += lane_fold(lsim)
    acc_ref[:, 2 * _LANES:3 * _LANES] += lane_fold(esim)


def supcon_loss(output, labels, temperature=1.0, *,
                mxu_dtype=None, block_m=None, block_n=None):
    """Supervised contrastive loss.

    Returns (loss, label_sum).  loss is 0.0 when label_sum == 0 (no positive
    pairs) -- check label_sum instead of forcing a host sync.  Fully jittable
    (temperature / mxu_dtype / block_* must be static under jit).
    """
    n, d = output.shape
    inv_t = 1.0 / float(temperature)
    compute_dtype = _pick_compute_dtype(output.dtype, mxu_dtype)

    # --- one-shot L2 normalization in XLA (hoisted out of the hot loop) ------
    xf = output.astype(jnp.float32)
    nrm = jnp.maximum(jnp.sqrt(jnp.sum(xf * xf, axis=-1, keepdims=True)), _EPS)
    xn = (xf / nrm).astype(compute_dtype)
    # Exact per-row self-similarity as the MXU sees it (diag removal; handles
    # bf16 rounding and all-zero rows without assuming sim_ii == 1).
    selfdot = jnp.sum(jnp.square(xn.astype(jnp.float32)), axis=-1)        # (n,)

    n_pad = _round_up(n, _LANES)                 # pad to 128, not to Tn
    tm, tn = _pick_tiles(n_pad, d, compute_dtype.itemsize, block_m, block_n)

    lab = labels.astype(jnp.int32)
    xp = xn
    if n_pad != n:
        xp = jnp.pad(xn, ((0, n_pad - n), (0, 0)))     # padded rows are exact zeros
        lab = jnp.pad(lab, (0, n_pad - n))
    lab_i = lab.reshape(n_pad, 1)
    lab_j = lab.reshape(1, n_pad)

    kernel = functools.partial(_supcon_kernel, inv_t=inv_t, n_valid=n,
                               mask_cols=(n_pad != n))
    grid = (n_pad // tm, n_pad // tn)
    est = _vmem_estimate(tm, tn, d, compute_dtype.itemsize)
    vmem_limit = max(48 * 1024 * 1024, int(est * 1.25))

    acc = pl.pallas_call(
        kernel,
        grid=grid,
        in_specs=[
            pl.BlockSpec((tm, d), lambda i, j: (i, 0)),   # resident row block
            pl.BlockSpec((tn, d), lambda i, j: (j, 0)),   # streamed col block
            pl.BlockSpec((tm, 1), lambda i, j: (i, 0)),   # row-block labels
            pl.BlockSpec((1, tn), lambda i, j: (0, j)),   # col-block labels
        ],
        out_shape=jax.ShapeDtypeStruct((n_pad, 3 * _LANES), jnp.float32),
        out_specs=pl.BlockSpec((tm, 3 * _LANES), lambda i, j: (i, 0)),
        compiler_params=pltpu.CompilerParams(
            dimension_semantics=("parallel", "arbitrary"),
            vmem_limit_bytes=vmem_limit),
    )(xp, xp, lab_i, lab_j)

    # --- tiny XLA epilogue on (N, 384) -> scalars ----------------------------
    same_rows = jnp.sum(acc[:n, 0 * _LANES:1 * _LANES], axis=-1)
    lsim_rows = jnp.sum(acc[:n, 1 * _LANES:2 * _LANES], axis=-1)
    s_rows = jnp.sum(acc[:n, 2 * _LANES:3 * _LANES], axis=-1)   # sum_j exp((sim-1)/T)

    n_f = jnp.float32(n)
    inv_t_f = jnp.float32(inv_t)
    label_sum = jnp.sum(same_rows) - n_f                      # diag of `same` is 1
    # reference divisor_i = sum_k exp((sim_ik - eye_ik)/T)
    #                     = e^{1/T} * (S_i - d_i) + d_i,  d_i = exp((sim_ii-1)/T)
    diag = jnp.exp((selfdot - 1.0) * inv_t_f)
    div_arg = jnp.maximum(s_rows - diag * (1.0 - jnp.exp(-inv_t_f)), jnp.float32(1e-37))
    log_div = inv_t_f + jnp.log(div_arg)
    numer = inv_t_f * (jnp.sum(lsim_rows) - jnp.sum(selfdot)) - n_f * jnp.sum(log_div)
    loss = jnp.where(label_sum != 0.0, -numer / label_sum, jnp.float32(0.0))
    return loss, label_sum


def supcon_loss_or_none(output, labels, temperature=1.0):
    """Torch-parity wrapper (returns None when there are no positive pairs).
    NOTE: forces a device->host sync; prefer supcon_loss() in training loops."""
    loss, label_sum = supcon_loss(output, labels, temperature)
    if float(label_sum) == 0.0:
        return None
    return loss


def _reference_supcon(output, labels, temperature=1.0):
    """Pure-jnp mirror of the PyTorch forward (f32), for validation."""
    output = output.astype(jnp.float32)
    label = (labels[None, :] == labels[:, None]).astype(jnp.float32)
    label = label - jnp.eye(label.shape[0], dtype=jnp.float32)
    norm = jnp.maximum(jnp.linalg.norm(output, axis=-1, keepdims=True), _EPS)
    xn = output / norm
    sim = xn @ xn.T
    dividend = jnp.exp(label * sim / temperature)
    divisor = jnp.sum(jnp.exp((sim - jnp.eye(sim.shape[0])) / temperature), axis=1)
    loss = -jnp.sum(jnp.log(dividend / divisor)) / jnp.sum(label)
    return loss, jnp.sum(label)


if __name__ == "__main__":
    key = jax.random.PRNGKey(0)
    k1, k2, k3, k4 = jax.random.split(key, 4)
    run = jax.jit(supcon_loss,
                  static_argnames=("temperature", "mxu_dtype", "block_m", "block_n"))

    cd32 = _pick_compute_dtype(jnp.float32)              # bf16 on v5e by default
    tol32 = 1e-4 if cd32 == jnp.dtype(jnp.float32) else 3e-2

    # --- f32, N a multiple of the tiles (no padding path) --------------------
    N, D = 128, 64
    x = jax.random.normal(k1, (N, D), dtype=jnp.float32)
    labels = jax.random.randint(k2, (N,), 0, 8, dtype=jnp.int32)
    loss, lsum = jax.block_until_ready(run(x, labels))
    ref_loss, ref_lsum = _reference_supcon(x, labels)
    assert float(lsum) > 0.0 and abs(float(lsum) - float(ref_lsum)) < 0.5
    assert jnp.allclose(loss, ref_loss, rtol=tol32, atol=tol32), (loss, ref_loss)

    # --- f32, ragged N (exercises pad/mask path) ------------------------------
    N2, D2 = 40, 48
    x2 = jax.random.normal(k3, (N2, D2), dtype=jnp.float32)
    labels2 = jax.random.randint(k4, (N2,), 0, 4, dtype=jnp.int32)
    loss2, lsum2 = jax.block_until_ready(run(x2, labels2))
    ref_loss2, ref_lsum2 = _reference_supcon(x2, labels2)
    assert abs(float(lsum2) - float(ref_lsum2)) < 0.5
    assert jnp.allclose(loss2, ref_loss2, rtol=tol32, atol=tol32), (loss2, ref_loss2)

    # --- non-default temperature (stabilized exp path), forced f32 MXU feed ---
    loss2t, _ = jax.block_until_ready(
        run(x2, labels2, temperature=0.1, mxu_dtype=jnp.float32))
    ref_loss2t, _ = _reference_supcon(x2, labels2, temperature=0.1)
    assert jnp.allclose(loss2t, ref_loss2t, rtol=2e-3, atol=2e-3), (loss2t, ref_loss2t)

    # --- bf16 input: bf16 DMA + bf16 MXU feed, f32 accumulation ---------------
    xb = x.astype(jnp.bfloat16)
    loss3, lsum3 = jax.block_until_ready(run(xb, labels))
    ref_loss3, _ = _reference_supcon(xb.astype(jnp.float32), labels)
    assert jnp.allclose(loss3, ref_loss3, rtol=3e-2, atol=3e-2), (loss3, ref_loss3)

    # --- torch-parity "no positive pairs" -> None -----------------------------
    assert supcon_loss_or_none(x2, jnp.arange(N2, dtype=jnp.int32)) is None

    print("KERNEL_OK")
</pallas_src>

<mosaic_0001>
module attributes {stable_mosaic.version = 11 : i64} {
  func.func @_supcon_kernel(%arg0: i32, %arg1: i32, %arg2: memref<64x64xf32, #tpu.memory_space<vmem>>, %arg3: memref<128x64xf32, #tpu.memory_space<vmem>>, %arg4: memref<64x1xi32, #tpu.memory_space<vmem>>, %arg5: memref<1x128xi32, #tpu.memory_space<vmem>>, %arg6: memref<64x384xf32, #tpu.memory_space<vmem>>) attributes {dimension_semantics = [#tpu.dimension_semantics<parallel>, #tpu.dimension_semantics<arbitrary>], iteration_bounds = array<i64: 2, 1>, scalar_prefetch = 0 : i64, scratch_operands = 0 : i64, tpu.core_type = #tpu.core_type<tc>, window_params = [{transform_indices = @transform_0, window_bounds = array<i64: 64, 64>}, {transform_indices = @transform_1, window_bounds = array<i64: 128, 64>}, {transform_indices = @transform_2, window_bounds = array<i64: 64, 1>}, {transform_indices = @transform_3, window_bounds = array<i64: 1, 128>}, {transform_indices = @transform_4, window_bounds = array<i64: 64, 384>}]} {
    %c0_i32 = arith.constant 0 : i32
    %0 = arith.cmpi eq, %arg1, %c0_i32 : i32
    %1 = arith.extui %0 : i1 to i32
    %c0_i32_0 = arith.constant 0 : i32
    %2 = arith.cmpi ne, %1, %c0_i32_0 : i32
    scf.if %2 {
      %cst_21 = arith.constant 0.000000e+00 : f32
      %29 = vector.broadcast %cst_21 : f32 to vector<64x384xf32>
      %c0_22 = arith.constant 0 : index
      %c0_23 = arith.constant 0 : index
      %30 = vector.load %arg6[%c0_22, %c0_23] : memref<64x384xf32, #tpu.memory_space<vmem>>, vector<64x384xf32>
      tpu.vector_store %arg6[%c0_22, %c0_23], %29 {strides = array<i32>} : memref<64x384xf32, #tpu.memory_space<vmem>>, vector<64x384xf32>,
    } else {
    }
    %c0 = arith.constant 0 : index
    %c0_1 = arith.constant 0 : index
    %3 = vector.load %arg2[%c0, %c0_1] : memref<64x64xf32, #tpu.memory_space<vmem>>, vector<64x64xf32>
    %c0_2 = arith.constant 0 : index
    %c0_3 = arith.constant 0 : index
    %4 = vector.load %arg3[%c0_2, %c0_3] : memref<128x64xf32, #tpu.memory_space<vmem>>, vector<128x64xf32>
    %cst = arith.constant dense<0.000000e+00> : vector<64x128xf32>
    %5 = tpu.matmul %3, %4, %cst {dimension_numbers = #tpu.dot_dimension_numbers<[1], [1], [0], [0], [0, 0, 1, 0], [], []>} : vector<64x64xf32>, vector<128x64xf32>, vector<64x128xf32> -> vector<64x128xf32>
    %c0_4 = arith.constant 0 : index
    %c0_5 = arith.constant 0 : index
    %6 = vector.load %arg4[%c0_4, %c0_5] : memref<64x1xi32, #tpu.memory_space<vmem>>, vector<64x1xi32>
    %c0_6 = arith.constant 0 : index
    %c0_7 = arith.constant 0 : index
    %7 = vector.load %arg5[%c0_6, %c0_7] : memref<1x128xi32, #tpu.memory_space<vmem>>, vector<1x128xi32>
    %8 = vector.broadcast %6 : vector<64x1xi32> to vector<64x128xi32>
    %9 = vector.broadcast %7 : vector<1x128xi32> to vector<64x128xi32>
    %10 = arith.cmpi eq, %8, %9 : vector<64x128xi32>
    %11 = arith.extui %10 : vector<64x128xi1> to vector<64x128xi32>
    %12 = arith.sitofp %11 : vector<64x128xi32> to vector<64x128xf32>
    %cst_8 = arith.constant 0.000000e+00 : f32
    %13 = vector.broadcast %cst_8 : f32 to vector<64x128xf32>
    %14 = arith.select %10, %5, %13 : vector<64x128xi1>, vector<64x128xf32>
    %cst_9 = arith.constant 1.000000e+00 : f32
    %15 = vector.broadcast %cst_9 : f32 to vector<64x128xf32>
    %16 = arith.subf %5, %15 : vector<64x128xf32>
    %cst_10 = arith.constant 1.000000e+00 : f32
    %17 = vector.broadcast %cst_10 : f32 to vector<64x128xf32>
    %18 = arith.mulf %16, %17 : vector<64x128xf32>
    %19 = math.exp %18 : vector<64x128xf32>
    %c0_11 = arith.constant 0 : index
    %c0_12 = arith.constant 0 : index
    %20 = vector.load %arg6[%c0_11, %c0_12] : memref<64x384xf32, #tpu.memory_space<vmem>>, vector<64x128xf32>
    %21 = arith.addf %20, %12 : vector<64x128xf32>
    %c0_13 = arith.constant 0 : index
    %c0_14 = arith.constant 0 : index
    %22 = vector.load %arg6[%c0_13, %c0_14] : memref<64x384xf32, #tpu.memory_space<vmem>>, vector<64x128xf32>
    tpu.vector_store %arg6[%c0_13, %c0_14], %21 {strides = array<i32>} : memref<64x384xf32, #tpu.memory_space<vmem>>, vector<64x128xf32>,
    %c0_15 = arith.constant 0 : index
    %c128 = arith.constant 128 : index
    %23 = vector.load %arg6[%c0_15, %c128] : memref<64x384xf32, #tpu.memory_space<vmem>>, vector<64x128xf32>
    %24 = arith.addf %23, %14 : vector<64x128xf32>
    %c0_16 = arith.constant 0 : index
    %c128_17 = arith.constant 128 : index
    %25 = vector.load %arg6[%c0_16, %c128_17] : memref<64x384xf32, #tpu.memory_space<vmem>>, vector<64x128xf32>
    tpu.vector_store %arg6[%c0_16, %c128_17], %24 {strides = array<i32>} : memref<64x384xf32, #tpu.memory_space<vmem>>, vector<64x128xf32>,
    %c0_18 = arith.constant 0 : index
    %c256 = arith.constant 256 : index
    %26 = vector.load %arg6[%c0_18, %c256] : memref<64x384xf32, #tpu.memory_space<vmem>>, vector<64x128xf32>
    %27 = arith.addf %26, %19 : vector<64x128xf32>
    %c0_19 = arith.constant 0 : index
    %c256_20 = arith.constant 256 : index
    %28 = vector.load %arg6[%c0_19, %c256_20] : memref<64x384xf32, #tpu.memory_space<vmem>>, vector<64x128xf32>
    tpu.vector_store %arg6[%c0_19, %c256_20], %27 {strides = array<i32>} : memref<64x384xf32, #tpu.memory_space<vmem>>, vector<64x128xf32>,
    return
  }
  func.func @transform_0(%arg0: i32, %arg1: i32) -> (i32, i32) {
    %c0_i32 = arith.constant 0 : i32
    %c0_i32_0 = arith.constant 0 : i32
    return %arg0, %c0_i32 : i32, i32
  }
  func.func @transform_1(%arg0: i32, %arg1: i32) -> (i32, i32) {
    %c0_i32 = arith.constant 0 : i32
    %c0_i32_0 = arith.constant 0 : i32
    return %arg1, %c0_i32 : i32, i32
  }
  func.func @transform_2(%arg0: i32, %arg1: i32) -> (i32, i32) {
    %c0_i32 = arith.constant 0 : i32
    %c0_i32_0 = arith.constant 0 : i32
    return %arg0, %c0_i32 : i32, i32
  }
  func.func @transform_3(%arg0: i32, %arg1: i32) -> (i32, i32) {
    %c0_i32 = arith.constant 0 : i32
    %c0_i32_0 = arith.constant 0 : i32
    return %c0_i32, %arg1 : i32, i32
  }
  func.func @transform_4(%arg0: i32, %arg1: i32) -> (i32, i32) {
    %c0_i32 = arith.constant 0 : i32
    %c0_i32_0 = arith.constant 0 : i32
    return %arg0, %c0_i32 : i32, i32
  }
}

</mosaic_0001>

<llo_original>
// kernel: supcon_loss.1
$region0: #{supcon_loss.1}
  #allocation0 [shape = 'u32[]', space=smem, size = 0x4, offset = 0x4, fixed_abs, tag = 'smem constant byte address 0x4 - core index']
  #allocation1 [shape = 'u32[72,128]{1,0:T(1,128)}', space=vmem, size = 0x9000, scoped, tag = 'internal scratch']
  %s0 = inlined_call_operand.vmem [shape: f32[128,64], index: 0, kind: input, shape index: {}, may-alias: {0,1}]
  %s1 = inlined_call_operand.vmem [shape: f32[128,64], index: 1, kind: input, shape index: {}, may-alias: {0,1}]
  %s2 = inlined_call_operand.vmem [shape: s32[128,1], index: 2, kind: input, shape index: {}]
  %s3 = inlined_call_operand.vmem [shape: s32[1,128], index: 3, kind: input, shape index: {}]
  %s4 = inlined_call_operand.vmem [shape: f32[128,384], index: 4, kind: output, shape index: {}]
  %s5 = sld [smem:[#allocation0]]
  $region53: #{supcon_loss.1} parent=0
    _
  %s7 = ssub.s32 1, %s5
  %s8 = scalar_select 0, %s7, %s5
  loop: start=0, step=1, limit=4
  $region2: #{supcon_loss.1} parent=0 // loop_pre_header
    _
  $region3: #{supcon_loss.1} parent=0 // loop_header
    %s10 = sphi 0, %s14
    %p11 = scmp.ge.s32.totalorder %s10, 4
    %s17 = sphi 0, %s29
    %s18 = sphi 0, %s25
    %s19 = sphi 0, %s17
    %s20 = sphi 0, %s18
    %s21 = sphi 0, %s19
    %s22 = sphi 0, %s20
    %s32 = sphi 0, %s34
    %s35 = sphi 0, %s32
    %s36 = sphi 0, %s35
    %s52 = sphi 0, %s36
    %s58 = sphi 0, %s60
    %s61 = sphi 0, %s58
    %s62 = sphi 0, %s61
    %s78 = sphi 0, %s62
    %s84 = sphi 0, %s86
    %s87 = sphi 0, %s84
    %s88 = sphi 0, %s87
    %s104 = sphi 0, %s88
    %s110 = sphi 0, %s112
    %s113 = sphi 0, %s110
    %s114 = sphi 0, %s113
    %s130 = sphi 0, %s114
    %s136 = sphi 0, %s138
    %s139 = sphi 0, %s136
    %s140 = sphi 0, %s139
    %s156 = sphi 0, %s140
  $region4: #{supcon_loss.1} parent=0 // loop_header_branch
    %13 = sbr.rel (%p11) target = $region8
  $region5: #{supcon_loss.1} parent=0 // loop_body
    %s15 = ssub.s32 %s10, 1
    %s16 = ssub.s32 %s10, 2
    %s23 = sadd.s32 1, %s18
    %p24 = scmp.ge.s32.totalorder %s23, 1
    %s25 = scalar_select %p24, 0, %s23
    %s26 = sadd.s32 1, %s17
    %s27 = scalar_select %p24, %s26, %s17
    %p28 = scmp.ge.s32.totalorder %s27, 2
    %s29 = scalar_select %p28, 0, %s27
    %s30 = ssub.s32 %s17, %s29
    %p31 = scmp.eq.s32.totalorder %s30, 0
    %s33 = sadd.s32 %s32, 1
    %s34 = scalar_select %p31, %s32, %s33
    %p37 = pneg %p31
    %p38 = scmp.eq.s32.totalorder %s10, 1
    %p39 = por %p37, %p38
    %p40 = scmp.ne.s32.totalorder %s32, %s35
    %p41 = scmp.eq.s32.totalorder %s10, 0
    %p42 = por %p40, %p41
    %p43 = scmp.ne.s32.totalorder %s32, %s35
    %p44 = scmp.eq.s32.totalorder %s15, 1
    %p45 = por %p43, %p44
    %p46 = scmp.ne.s32.totalorder %s35, %s36
    %p47 = scmp.eq.s32.totalorder %s15, 0
    %p48 = por %p46, %p47
    %p49 = scmp.ne.s32.totalorder %s35, %s36
    %p50 = scmp.eq.s32.totalorder %s16, 1
    %p51 = por %p49, %p50
    %p53 = scmp.ne.s32.totalorder %s36, %s52
    %p54 = scmp.eq.s32.totalorder %s16, 0
    %p55 = por %p53, %p54
    %s56 = ssub.s32 %s18, %s25
    %p57 = scmp.eq.s32.totalorder %s56, 0
    %s59 = sadd.s32 %s58, 1
    %s60 = scalar_select %p57, %s58, %s59
    %p63 = pneg %p57
    %p64 = scmp.eq.s32.totalorder %s10, 1
    %p65 = por %p63, %p64
    %p66 = scmp.ne.s32.totalorder %s58, %s61
    %p67 = scmp.eq.s32.totalorder %s10, 0
    %p68 = por %p66, %p67
    %p69 = scmp.ne.s32.totalorder %s58, %s61
    %p70 = scmp.eq.s32.totalorder %s15, 1
    %p71 = por %p69, %p70
    %p72 = scmp.ne.s32.totalorder %s61, %s62
    %p73 = scmp.eq.s32.totalorder %s15, 0
    %p74 = por %p72, %p73
    %p75 = scmp.ne.s32.totalorder %s61, %s62
    %p76 = scmp.eq.s32.totalorder %s16, 1
    %p77 = por %p75, %p76
    %p79 = scmp.ne.s32.totalorder %s62, %s78
    %p80 = scmp.eq.s32.totalorder %s16, 0
    %p81 = por %p79, %p80
    %s82 = ssub.s32 %s17, %s29
    %p83 = scmp.eq.s32.totalorder %s82, 0
    %s85 = sadd.s32 %s84, 1
    %s86 = scalar_select %p83, %s84, %s85
    %p89 = pneg %p83
    %p90 = scmp.eq.s32.totalorder %s10, 1
    %p91 = por %p89, %p90
    %p92 = scmp.ne.s32.totalorder %s84, %s87
    %p93 = scmp.eq.s32.totalorder %s10, 0
    %p94 = por %p92, %p93
    %p95 = scmp.ne.s32.totalorder %s84, %s87
    %p96 = scmp.eq.s32.totalorder %s15, 1
    %p97 = por %p95, %p96
    %p98 = scmp.ne.s32.totalorder %s87, %s88
    %p99 = scmp.eq.s32.totalorder %s15, 0
    %p100 = por %p98, %p99
    %p101 = scmp.ne.s32.totalorder %s87, %s88
    %p102 = scmp.eq.s32.totalorder %s16, 1
    %p103 = por %p101, %p102
    %p105 = scmp.ne.s32.totalorder %s88, %s104
    %p106 = scmp.eq.s32.totalorder %s16, 0
    %p107 = por %p105, %p106
    %s108 = ssub.s32 %s18, %s25
    %p109 = scmp.eq.s32.totalorder %s108, 0
    %s111 = sadd.s32 %s110, 1
    %s112 = scalar_select %p109, %s110, %s111
    %p115 = pneg %p109
    %p116 = scmp.eq.s32.totalorder %s10, 1
    %p117 = por %p115, %p116
    %p118 = scmp.ne.s32.totalorder %s110, %s113
    %p119 = scmp.eq.s32.totalorder %s10, 0
    %p120 = por %p118, %p119
    %p121 = scmp.ne.s32.totalorder %s110, %s113
    %p122 = scmp.eq.s32.totalorder %s15, 1
    %p123 = por %p121, %p122
    %p124 = scmp.ne.s32.totalorder %s113, %s114
    %p125 = scmp.eq.s32.totalorder %s15, 0
    %p126 = por %p124, %p125
    %p127 = scmp.ne.s32.totalorder %s113, %s114
    %p128 = scmp.eq.s32.totalorder %s16, 1
    %p129 = por %p127, %p128
    %p131 = scmp.ne.s32.totalorder %s114, %s130
    %p132 = scmp.eq.s32.totalorder %s16, 0
    %p133 = por %p131, %p132
    %s134 = ssub.s32 %s17, %s29
    %p135 = scmp.eq.s32.totalorder %s134, 0
    %s137 = sadd.s32 %s136, 1
    %s138 = scalar_select %p135, %s136, %s137
    %p141 = pneg %p135
    %p142 = scmp.eq.s32.totalorder %s10, 1
    %p143 = por %p141, %p142
    %p144 = scmp.ne.s32.totalorder %s136, %s139
    %p145 = scmp.eq.s32.totalorder %s10, 0
    %p146 = por %p144, %p145
    %p147 = scmp.ne.s32.totalorder %s136, %s139
    %p148 = scmp.eq.s32.totalorder %s15, 1
    %p149 = por %p147, %p148
    %p150 = scmp.ne.s32.totalorder %s139, %s140
    %p151 = scmp.eq.s32.totalorder %s15, 0
    %p152 = por %p150, %p151
    %p153 = scmp.ne.s32.totalorder %s139, %s140
    %p154 = scmp.eq.s32.totalorder %s16, 1
    %p155 = por %p153, %p154
    %p157 = scmp.ne.s32.totalorder %s140, %s156
    %p158 = scmp.eq.s32.totalorder %s16, 0
    %p159 = por %p157, %p158
    %p160 = scmp.le.s32.totalorder 1, %s10
    %p161 = scmp.lt.s32.totalorder %s10, 3
    %p162 = pnand %p160, %p161
    %p163 = pneg %p162
    // Predicated region
    $region9: #{supcon_loss.1} parent=5 // pred_check
      _
    $region10: #{supcon_loss.1} parent=5 // pred_check_branch
      %165 = sbr.rel (%p162) target = $region12
    $region11: #{supcon_loss.1} parent=5 // pred_region
      %s166 = ssub.s32 %s10, 1
      // Predicated region
      $region13: #{supcon_loss.1} parent=11 // pred_check
        %p167 = pneg %p74
      $region14: #{supcon_loss.1} parent=11 // pred_check_branch
        %169 = sbr.rel (%p167) target = $region16
      $region15: #{supcon_loss.1} parent=11 // pred_region
        %s170 = smul.u32 16, %s20
        %p171 = scmp.lt.s32.totalorder %s170, 15
        %s172 = scalar_select %p171, %s170, 15
        %s173 = smul.addr %s172, 8
        %s174 = scalar_lea.vmem %s1, %s173
        %s175 = smul.u32 16, %s20
      $region16: #{supcon_loss.1} parent=11 // pred_fallthru
        _
      // Predicated region
      $region17: #{supcon_loss.1} parent=11 // pred_check
        %p176 = pneg %p126
      $region18: #{supcon_loss.1} parent=11 // pred_check_branch
        %178 = sbr.rel (%p176) target = $region20
      $region19: #{supcon_loss.1} parent=11 // pred_region
        %p179 = scmp.lt.s32.totalorder %s20, 0
        %s180 = scalar_select %p179, %s20, 0
        %s181 = scalar_lea.vmem %s3, %s180
      $region20: #{supcon_loss.1} parent=11 // pred_fallthru
        _
    $region12: #{supcon_loss.1} parent=5 // pred_fallthru
      _
    %p182 = scmp.lt.s32.totalorder %s10, 2
    // Predicated region
    $region21: #{supcon_loss.1} parent=5 // pred_check
      %p183 = pneg %p182
    $region22: #{supcon_loss.1} parent=5 // pred_check_branch
      %185 = sbr.rel (%p183) target = $region24
    $region23: #{supcon_loss.1} parent=5 // pred_region
      // Predicated region
      $region25: #{supcon_loss.1} parent=23 // pred_check
        %p186 = pneg %p42
      $region26: #{supcon_loss.1} parent=23 // pred_check_branch
        %188 = sbr.rel (%p186) target = $region28
      $region27: #{supcon_loss.1} parent=23 // pred_region
        %s189 = smul.u32 8, %s17
        %p190 = scmp.lt.s32.totalorder %s189, 15
        %s191 = scalar_select %p190, %s189, 15
        %s192 = smul.addr %s191, 8
        %s193 = scalar_lea.vmem %s0, %s192
        %s194 = smul.u32 8, %s17
      $region28: #{supcon_loss.1} parent=23 // pred_fallthru
        _
      // Predicated region
      $region29: #{supcon_loss.1} parent=23 // pred_check
        %p195 = pneg %p94
      $region30: #{supcon_loss.1} parent=23 // pred_check_branch
        %197 = sbr.rel (%p195) target = $region32
      $region31: #{supcon_loss.1} parent=23 // pred_region
        %s198 = smul.u32 8, %s17
        %p199 = scmp.lt.s32.totalorder %s198, 15
        %s200 = scalar_select %p199, %s198, 15
        %s201 = smul.addr %s200, 8
        %s202 = scalar_lea.vmem %s2, %s201
        %s203 = smul.u32 8, %s17
      $region32: #{supcon_loss.1} parent=23 // pred_fallthru
        _
    $region24: #{supcon_loss.1} parent=5 // pred_fallthru
      _
    %p204 = scmp.le.s32.totalorder 1, %s10
    %p205 = scmp.lt.s32.totalorder %s10, 3
    %p206 = pnand %p204, %p205
    %p207 = pneg %p206
    // Predicated region
    $region33: #{supcon_loss.1} parent=5 // pred_check
      _
    $region34: #{supcon_loss.1} parent=5 // pred_check_branch
      %209 = sbr.rel (%p206) target = $region36
    $region35: #{supcon_loss.1} parent=5 // pred_region
      %s210 = ssub.s32 %s10, 1
      %s211 = smul.u32 8, %s19
      %p212 = scmp.lt.s32.totalorder %s211, 15
      %s213 = scalar_select %p212, %s211, 15
      %s214 = smul.addr %s213, 8
      %s215 = scalar_lea.vmem %s0, %s214
      %p216 = pneg %p48
      %p217 = pneg %p45
      %s218 = smul.u32 16, %s20
      %p219 = scmp.lt.s32.totalorder %s218, 15
      %s220 = scalar_select %p219, %s218, 15
      %s221 = smul.addr %s220, 8
      %s222 = scalar_lea.vmem %s1, %s221
      %p223 = pneg %p74
      %p224 = pneg %p71
      %s225 = smul.u32 8, %s19
      %p226 = scmp.lt.s32.totalorder %s225, 15
      %s227 = scalar_select %p226, %s225, 15
      %s228 = smul.addr %s227, 8
      %s229 = scalar_lea.vmem %s2, %s228
      %p230 = pneg %p100
      %p231 = pneg %p97
      %p232 = scmp.lt.s32.totalorder %s20, 0
      %s233 = scalar_select %p232, %s20, 0
      %s234 = scalar_lea.vmem %s3, %s233
      %p235 = pneg %p126
      %p236 = pneg %p123
      %p237 = pneg %p152
      %p238 = pneg %p149
      %s239 = smul.u32 8, %s19
      %p240 = scmp.lt.s32.totalorder %s239, 15
      %s241 = scalar_select %p240, %s239, 15
      %s242 = smul.addr %s241, 3
      %s243 = smul.addr %s242, 8
      %s244 = scalar_lea.vmem %s4, %s243
      %s245 = smul.u32 8, %s19
      %p246 = scmp.lt.s32.totalorder %s245, 15
      %s247 = scalar_select %p246, %s245, 15
      %s248 = smul.addr %s247, 8
      %s249 = scalar_lea.vmem %s0, %s248
      %s250 = smul.u32 8, %s19
      %s251 = smul.u32 16, %s20
      %p252 = scmp.lt.s32.totalorder %s251, 15
      %s253 = scalar_select %p252, %s251, 15
      %s254 = smul.addr %s253, 8
      %s255 = scalar_lea.vmem %s1, %s254
      %s256 = smul.u32 16, %s20
      %s257 = smul.u32 8, %s19
      %p258 = scmp.lt.s32.totalorder %s257, 15
      %s259 = scalar_select %p258, %s257, 15
      %s260 = smul.addr %s259, 8
      %s261 = scalar_lea.vmem %s2, %s260
      %s262 = smul.u32 8, %s19
      %p263 = scmp.lt.s32.totalorder %s20, 0
      %s264 = scalar_select %p263, %s20, 0
      %s265 = scalar_lea.vmem %s3, %s264
      %s266 = smul.u32 8, %s19
      %p267 = scmp.lt.s32.totalorder %s266, 15
      %s268 = scalar_select %p267, %s266, 15
      %s269 = smul.addr %s268, 3
      %s270 = smul.addr %s269, 8
      %s271 = scalar_lea.vmem %s4, %s270
      %s272 = smul.u32 8, %s19
      %p273 = scmp.eq.s32.totalorder %s20, 0
      // Predicated region
      $region37: #{supcon_loss.1} parent=35 // pred_check
        %p274 = pneg %p273
      $region38: #{supcon_loss.1} parent=35 // pred_check_branch
        %276 = sbr.rel (%p274) target = $region40
      $region39: #{supcon_loss.1} parent=35 // pred_region
        %277 = vst [vmem:[%s271] sm:$0xff] 0.0
        %278 = vst [vmem:[%s271 + $0x8] sm:$0xff] 0.0
        %279 = vst [vmem:[%s271 + $0x10] sm:$0xff] 0.0
        %280 = vst [vmem:[%s271 + $0x18] sm:$0xff] 0.0
        %281 = vst [vmem:[%s271 + $0x20] sm:$0xff] 0.0
        %282 = vst [vmem:[%s271 + $0x28] sm:$0xff] 0.0
        %283 = vst [vmem:[%s271 + $0x30] sm:$0xff] 0.0
        %284 = vst [vmem:[%s271 + $0x38] sm:$0xff] 0.0
        %285 = vst [vmem:[%s271 + $0x40] sm:$0xff] 0.0
        %286 = vst [vmem:[%s271 + $0x48] sm:$0xff] 0.0
        %287 = vst [vmem:[%s271 + $0x50] sm:$0xff] 0.0
        %288 = vst [vmem:[%s271 + $0x58] sm:$0xff] 0.0
        %289 = vst [vmem:[%s271 + $0x60] sm:$0xff] 0.0
        %290 = vst [vmem:[%s271 + $0x68] sm:$0xff] 0.0
        %291 = vst [vmem:[%s271 + $0x70] sm:$0xff] 0.0
        %292 = vst [vmem:[%s271 + $0x78] sm:$0xff] 0.0
        %293 = vst [vmem:[%s271 + $0x80] sm:$0xff] 0.0
        %294 = vst [vmem:[%s271 + $0x88] sm:$0xff] 0.0
        %295 = vst [vmem:[%s271 + $0x90] sm:$0xff] 0.0
        %296 = vst [vmem:[%s271 + $0x98] sm:$0xff] 0.0
        %297 = vst [vmem:[%s271 + $0xa0] sm:$0xff] 0.0
        %298 = vst [vmem:[%s271 + $0xa8] sm:$0xff] 0.0
        %299 = vst [vmem:[%s271 + $0xb0] sm:$0xff] 0.0
        %300 = vst [vmem:[%s271 + $0xb8] sm:$0xff] 0.0
      $region40: #{supcon_loss.1} parent=35 // pred_fallthru
        _
      %v301 = vld [vmem:[%s249] sm:$0xff]
      %v302 = vld [vmem:[%s249 + $0x8] sm:$0xff]
      %v303 = vld [vmem:[%s249 + $0x10] sm:$0xff]
      %v304 = vld [vmem:[%s249 + $0x18] sm:$0xff]
      %v305 = vld [vmem:[%s249 + $0x20] sm:$0xff]
      %v306 = vld [vmem:[%s249 + $0x28] sm:$0xff]
      %v307 = vld [vmem:[%s249 + $0x30] sm:$0xff]
      %v308 = vld [vmem:[%s249 + $0x38] sm:$0xff]
      %v309 = vld [vmem:[%s255] sm:$0xff]
      %v310 = vld [vmem:[%s255 + $0x8] sm:$0xff]
      %v311 = vld [vmem:[%s255 + $0x10] sm:$0xff]
      %v312 = vld [vmem:[%s255 + $0x18] sm:$0xff]
      %v313 = vld [vmem:[%s255 + $0x20] sm:$0xff]
      %v314 = vld [vmem:[%s255 + $0x28] sm:$0xff]
      %v315 = vld [vmem:[%s255 + $0x30] sm:$0xff]
      %v316 = vld [vmem:[%s255 + $0x38] sm:$0xff]
      %v317 = vld [vmem:[%s255 + $0x40] sm:$0xff]
      %v318 = vld [vmem:[%s255 + $0x48] sm:$0xff]
      %v319 = vld [vmem:[%s255 + $0x50] sm:$0xff]
      %v320 = vld [vmem:[%s255 + $0x58] sm:$0xff]
      %v321 = vld [vmem:[%s255 + $0x60] sm:$0xff]
      %v322 = vld [vmem:[%s255 + $0x68] sm:$0xff]
      %v323 = vld [vmem:[%s255 + $0x70] sm:$0xff]
      %v324 = vld [vmem:[%s255 + $0x78] sm:$0xff]
      %vm325 = vcmask 523264
      %v327 = vsel %vm325, %v301, 0
      %v330 = vsel %vm325, %v302, 0
      %v333 = vsel %vm325, %v303, 0
      %v336 = vsel %vm325, %v304, 0
      %v339 = vsel %vm325, %v305, 0
      %v342 = vsel %vm325, %v306, 0
      %v345 = vsel %vm325, %v307, 0
      %v348 = vsel %vm325, %v308, 0
      %v351 = vsel %vm325, %v309, 0
      %v354 = vsel %vm325, %v310, 0
      %v357 = vsel %vm325, %v311, 0
      %v360 = vsel %vm325, %v312, 0
      %v363 = vsel %vm325, %v313, 0
      %v366 = vsel %vm325, %v314, 0
      %v369 = vsel %vm325, %v315, 0
      %v372 = vsel %vm325, %v316, 0
      %v375 = vsel %vm325, %v317, 0
      %v378 = vsel %vm325, %v318, 0
      %v381 = vsel %vm325, %v319, 0
      %v384 = vsel %vm325, %v320, 0
      %v387 = vsel %vm325, %v321, 0
      %v390 = vsel %vm325, %v322, 0
      %v393 = vsel %vm325, %v323, 0
      %v396 = vsel %vm325, %v324, 0
      %398 = vmatpush.xpose.msra.mxu0 %v396
      %399 = vmatpush.xpose.msra.mxu0 %v393
      %400 = vmatpush.xpose.msra.mxu0 %v390
      %401 = vmatpush.xpose.msra.mxu0 %v387
      %402 = vmatpush.xpose.msra.mxu0 %v384
      %403 = vmatpush.xpose.msra.mxu0 %v381
      %404 = vmatpush.xpose.msra.mxu0 %v378
      %405 = vmatpush.xpose.msra.mxu0 %v375
      %406 = vmatpush.xpose.msra.mxu0 %v372
      %407 = vmatpush.xpose.msra.mxu0 %v369
      %408 = vmatpush.xpose.msra.mxu0 %v366
      %409 = vmatpush.xpose.msra.mxu0 %v363
      %410 = vmatpush.xpose.msra.mxu0 %v360
      %411 = vmatpush.xpose.msra.mxu0 %v357
      %412 = vmatpush.xpose.msra.mxu0 %v354
      %413 = vmatpush.xpose.msra.mxu0 %v351
      %414 = vmatmul.f32.gmra.mxu0 %v327
      %v415 = vpop.f32.mrf.mxu0
      %v416 = vadd.f32 0.0, %v415
      %417 = vmatmul.f32.gmra.mxu0 %v330
      %v418 = vpop.f32.mrf.mxu0
      %v419 = vadd.f32 0.0, %v418
      %420 = vmatmul.f32.gmra.mxu0 %v333
      %v421 = vpop.f32.mrf.mxu0
      %v422 = vadd.f32 0.0, %v421
      %423 = vmatmul.f32.gmra.mxu0 %v336
      %v424 = vpop.f32.mrf.mxu0
      %v425 = vadd.f32 0.0, %v424
      %426 = vmatmul.f32.gmra.mxu0 %v339
      %v427 = vpop.f32.mrf.mxu0
      %v428 = vadd.f32 0.0, %v427
      %429 = vmatmul.f32.gmra.mxu0 %v342
      %v430 = vpop.f32.mrf.mxu0
      %v431 = vadd.f32 0.0, %v430
      %432 = vmatmul.f32.gmra.mxu0 %v345
      %v433 = vpop.f32.mrf.mxu0
      %v434 = vadd.f32 0.0, %v433
      %435 = vmatmul.f32.gmra.mxu0 %v348
      %v436 = vpop.f32.mrf.mxu0
      %v437 = vadd.f32 0.0, %v436
      %438 = vdwg.mxu0
      %v439 = vld [vmem:[%s261] sm:$0xff]
      %v440 = vld [vmem:[%s261 + $0x8] sm:$0xff]
      %v441 = vld [vmem:[%s261 + $0x10] sm:$0xff]
      %v442 = vld [vmem:[%s261 + $0x18] sm:$0xff]
      %v443 = vld [vmem:[%s261 + $0x20] sm:$0xff]
      %v444 = vld [vmem:[%s261 + $0x28] sm:$0xff]
      %v445 = vld [vmem:[%s261 + $0x30] sm:$0xff]
      %v446 = vld [vmem:[%s261 + $0x38] sm:$0xff]
      %v447 = vld [vmem:[%s265] sm:$0x1]
      %448 = vset.pattern.permute.xlu0 0
      %449 = vperm.xlu0 %448, %v439
      %v450 = vpop.permute.xlu0 %449
      %451 = vset.pattern.permute.xlu0 0
      %452 = vperm.xlu0 %451, %v440
      %v453 = vpop.permute.xlu0 %452
      %454 = vset.pattern.permute.xlu0 0
      %455 = vperm.xlu0 %454, %v441
      %v456 = vpop.permute.xlu0 %455
      %457 = vset.pattern.permute.xlu0 0
      %458 = vperm.xlu0 %457, %v442
      %v459 = vpop.permute.xlu0 %458
      %460 = vset.pattern.permute.xlu0 0
      %461 = vperm.xlu0 %460, %v443
      %v462 = vpop.permute.xlu0 %461
      %463 = vset.pattern.permute.xlu0 0
      %464 = vperm.xlu0 %463, %v444
      %v465 = vpop.permute.xlu0 %464
      %466 = vset.pattern.permute.xlu0 0
      %467 = vperm.xlu0 %466, %v445
      %v468 = vpop.permute.xlu0 %467
      %469 = vset.pattern.permute.xlu0 0
      %470 = vperm.xlu0 %469, %v446
      %v471 = vpop.permute.xlu0 %470
      %v472 = vperm.slane %v447, 0
      %vm473 = vcmp.eq.s32.totalorder %v450, %v472
      %vm474 = vcmp.eq.s32.totalorder %v453, %v472
      %vm475 = vcmp.eq.s32.totalorder %v456, %v472
      %vm476 = vcmp.eq.s32.totalorder %v459, %v472
      %vm477 = vcmp.eq.s32.totalorder %v462, %v472
      %vm478 = vcmp.eq.s32.totalorder %v465, %v472
      %vm479 = vcmp.eq.s32.totalorder %v468, %v472
      %vm480 = vcmp.eq.s32.totalorder %v471, %v472
      %v481 = vsel %vm473, 1, 0
      %v482 = vsel %vm474, 1, 0
      %v483 = vsel %vm475, 1, 0
      %v484 = vsel %vm476, 1, 0
      %v485 = vsel %vm477, 1, 0
      %v486 = vsel %vm478, 1, 0
      %v487 = vsel %vm479, 1, 0
      %v488 = vsel %vm480, 1, 0
      %v489 = vcvt.s32.f32 %v481
      %v490 = vcvt.s32.f32 %v482
      %v491 = vcvt.s32.f32 %v483
      %v492 = vcvt.s32.f32 %v484
      %v493 = vcvt.s32.f32 %v485
      %v494 = vcvt.s32.f32 %v486
      %v495 = vcvt.s32.f32 %v487
      %v496 = vcvt.s32.f32 %v488
      %v497 = vsel %vm473, %v416, 0.0
      %v498 = vsel %vm474, %v419, 0.0
      %v499 = vsel %vm475, %v422, 0.0
      %v500 = vsel %vm476, %v425, 0.0
      %v501 = vsel %vm477, %v428, 0.0
      %v502 = vsel %vm478, %v431, 0.0
      %v503 = vsel %vm479, %v434, 0.0
      %v504 = vsel %vm480, %v437, 0.0
      %v505 = vsub.f32 %v416, 1.0
      %v506 = vsub.f32 %v419, 1.0
      %v507 = vsub.f32 %v422, 1.0
      %v508 = vsub.f32 %v425, 1.0
      %v509 = vsub.f32 %v428, 1.0
      %v510 = vsub.f32 %v431, 1.0
      %v511 = vsub.f32 %v434, 1.0
      %v512 = vsub.f32 %v437, 1.0
      %v513 = vmul.f32 %v505, 1.442695
      %v514 = vpow.pop %v513
      %v515 = vmul.f32 %v506, 1.442695
      %v516 = vpow.pop %v515
      %v517 = vmul.f32 %v507, 1.442695
      %v518 = vpow.pop %v517
      %v519 = vmul.f32 %v508, 1.442695
      %v520 = vpow.pop %v519
      %v521 = vmul.f32 %v509, 1.442695
      %v522 = vpow.pop %v521
      %v523 = vmul.f32 %v510, 1.442695
      %v524 = vpow.pop %v523
      %v525 = vmul.f32 %v511, 1.442695
      %v526 = vpow.pop %v525
      %v527 = vmul.f32 %v512, 1.442695
      %v528 = vpow.pop %v527
      %v529 = vld [vmem:[%s271] sm:$0xff]
      %v530 = vld [vmem:[%s271 + $0x18] sm:$0xff]
      %v531 = vld [vmem:[%s271 + $0x30] sm:$0xff]
      %v532 = vld [vmem:[%s271 + $0x48] sm:$0xff]
      %v533 = vld [vmem:[%s271 + $0x60] sm:$0xff]
      %v534 = vld [vmem:[%s271 + $0x78] sm:$0xff]
      %v535 = vld [vmem:[%s271 + $0x90] sm:$0xff]
      %v536 = vld [vmem:[%s271 + $0xa8] sm:$0xff]
      %v537 = vadd.f32 %v529, %v489
      %v538 = vadd.f32 %v530, %v490
      %v539 = vadd.f32 %v531, %v491
      %v540 = vadd.f32 %v532, %v492
      %v541 = vadd.f32 %v533, %v493
      %v542 = vadd.f32 %v534, %v494
      %v543 = vadd.f32 %v535, %v495
      %v544 = vadd.f32 %v536, %v496
      %545 = vst [vmem:[%s271] sm:$0xff] %v537
      %546 = vst [vmem:[%s271 + $0x18] sm:$0xff] %v538
      %547 = vst [vmem:[%s271 + $0x30] sm:$0xff] %v539
      %548 = vst [vmem:[%s271 + $0x48] sm:$0xff] %v540
      %549 = vst [vmem:[%s271 + $0x60] sm:$0xff] %v541
      %550 = vst [vmem:[%s271 + $0x78] sm:$0xff] %v542
      %551 = vst [vmem:[%s271 + $0x90] sm:$0xff] %v543
      %552 = vst [vmem:[%s271 + $0xa8] sm:$0xff] %v544
      %v553 = vld [vmem:[%s271 + $0x8] sm:$0xff]
      %v554 = vld [vmem:[%s271 + $0x20] sm:$0xff]
      %v555 = vld [vmem:[%s271 + $0x38] sm:$0xff]
      %v556 = vld [vmem:[%s271 + $0x50] sm:$0xff]
      %v557 = vld [vmem:[%s271 + $0x68] sm:$0xff]
      %v558 = vld [vmem:[%s271 + $0x80] sm:$0xff]
      %v559 = vld [vmem:[%s271 + $0x98] sm:$0xff]
      %v560 = vld [vmem:[%s271 + $0xb0] sm:$0xff]
      %v561 = vadd.f32 %v553, %v497
      %v562 = vadd.f32 %v554, %v498
      %v563 = vadd.f32 %v555, %v499
      %v564 = vadd.f32 %v556, %v500
      %v565 = vadd.f32 %v557, %v501
      %v566 = vadd.f32 %v558, %v502
      %v567 = vadd.f32 %v559, %v503
      %v568 = vadd.f32 %v560, %v504
      %569 = vst [vmem:[%s271 + $0x8] sm:$0xff] %v561
      %570 = vst [vmem:[%s271 + $0x20] sm:$0xff] %v562
      %571 = vst [vmem:[%s271 + $0x38] sm:$0xff] %v563
      %572 = vst [vmem:[%s271 + $0x50] sm:$0xff] %v564
      %573 = vst [vmem:[%s271 + $0x68] sm:$0xff] %v565
      %574 = vst [vmem:[%s271 + $0x80] sm:$0xff] %v566
      %575 = vst [vmem:[%s271 + $0x98] sm:$0xff] %v567
      %576 = vst [vmem:[%s271 + $0xb0] sm:$0xff] %v568
      %v577 = vld [vmem:[%s271 + $0x10] sm:$0xff]
      %v578 = vld [vmem:[%s271 + $0x28] sm:$0xff]
      %v579 = vld [vmem:[%s271 + $0x40] sm:$0xff]
      %v580 = vld [vmem:[%s271 + $0x58] sm:$0xff]
      %v581 = vld [vmem:[%s271 + $0x70] sm:$0xff]
      %v582 = vld [vmem:[%s271 + $0x88] sm:$0xff]
      %v583 = vld [vmem:[%s271 + $0xa0] sm:$0xff]
      %v584 = vld [vmem:[%s271 + $0xb8] sm:$0xff]
      %v585 = vadd.f32 %v577, %v514
      %v586 = vadd.f32 %v578, %v516
      %v587 = vadd.f32 %v579, %v518
      %v588 = vadd.f32 %v580, %v520
      %v589 = vadd.f32 %v581, %v522
      %v590 = vadd.f32 %v582, %v524
      %v591 = vadd.f32 %v583, %v526
      %v592 = vadd.f32 %v584, %v528
      %593 = vst [vmem:[%s271 + $0x10] sm:$0xff] %v585
      %594 = vst [vmem:[%s271 + $0x28] sm:$0xff] %v586
      %595 = vst [vmem:[%s271 + $0x40] sm:$0xff] %v587
      %596 = vst [vmem:[%s271 + $0x58] sm:$0xff] %v588
      %597 = vst [vmem:[%s271 + $0x70] sm:$0xff] %v589
      %598 = vst [vmem:[%s271 + $0x88] sm:$0xff] %v590
      %599 = vst [vmem:[%s271 + $0xa0] sm:$0xff] %v591
      %600 = vst [vmem:[%s271 + $0xb8] sm:$0xff] %v592
      %s601 = smul.u32 8, %s19
      %p602 = scmp.lt.s32.totalorder %s601, 15
      %s603 = scalar_select %p602, %s601, 15
      %s604 = smul.addr %s603, 3
      %s605 = smul.addr %s604, 8
      %s606 = scalar_lea.vmem %s4, %s605
      // Predicated region
      $region41: #{supcon_loss.1} parent=35 // pred_check
        %p607 = pneg %p149
      $region42: #{supcon_loss.1} parent=35 // pred_check_branch
        %609 = sbr.rel (%p607) target = $region44
      $region43: #{supcon_loss.1} parent=35 // pred_region
        %s610 = smul.u32 8, %s19
      $region44: #{supcon_loss.1} parent=35 // pred_fallthru
        _
    $region36: #{supcon_loss.1} parent=5 // pred_fallthru
      _
    %p611 = scmp.le.s32.totalorder 2, %s10
    // Predicated region
    $region45: #{supcon_loss.1} parent=5 // pred_check
      %p612 = pneg %p611
    $region46: #{supcon_loss.1} parent=5 // pred_check_branch
      %614 = sbr.rel (%p612) target = $region48
    $region47: #{supcon_loss.1} parent=5 // pred_region
      %s615 = ssub.s32 %s10, 2
      // Predicated region
      $region49: #{supcon_loss.1} parent=47 // pred_check
        %p616 = pneg %p155
      $region50: #{supcon_loss.1} parent=47 // pred_check_branch
        %618 = sbr.rel (%p616) target = $region52
      $region51: #{supcon_loss.1} parent=47 // pred_region
        %s619 = smul.u32 8, %s21
        %p620 = scmp.lt.s32.totalorder %s619, 15
        %s621 = scalar_select %p620, %s619, 15
        %s622 = smul.addr %s621, 3
        %s623 = smul.addr %s622, 8
        %s624 = scalar_lea.vmem %s4, %s623
      $region52: #{supcon_loss.1} parent=47 // pred_fallthru
        _
    $region48: #{supcon_loss.1} parent=5 // pred_fallthru
      _
  $region6: #{supcon_loss.1} parent=0 // loop_footer
    %s14 = sadd.s32 1, %s10
  $region7: #{supcon_loss.1} parent=0 // loop_footer_branch
    %9 = sbr.rel target = $region3
  $region8: #{supcon_loss.1} parent=0 // loop_exit
    _

</llo_original>
